<compile_context>
chip_gen: v7x
topology: tpu7x:2x2x1
jax: 0.10.0
libtpu: 0.0.40
codegen_flags: <defaults>
</compile_context>

<pallas_src>
import jax
import jax.numpy as jnp
from jax.experimental import pallas as pl
from jax.experimental.pallas import tpu as pltpu


def cbow_kernel(idx_ref, emb_hbm, wt_ref, b_ref, out_ref, gather_buf, sem):
    # idx_ref   : SMEM (n_ctx,) int32       -- scalar-prefetched token ids
    # emb_hbm   : HBM  (V, E)               -- embedding table (raw ref, no auto-DMA)
    # wt_ref    : VMEM (E, TV)              -- pre-transposed linear1.weight tile
    # b_ref     : VMEM (1, TV)              -- linear1.bias tile
    # out_ref   : VMEM (1, TV)              -- logits tile
    # gather_buf: VMEM (n_ctx, E) scratch   -- gathered embedding rows
    # sem       : DMA semaphores (n_ctx,)
    n_ctx = idx_ref.shape[0]

    # Gather only the n_ctx needed embedding rows from HBM into VMEM.
    copies = []
    for c in range(n_ctx):
        cp = pltpu.make_async_copy(
            emb_hbm.at[pl.ds(idx_ref[c], 1), :],
            gather_buf.at[pl.ds(c, 1), :],
            sem.at[c],
        )
        cp.start()
        copies.append(cp)
    for cp in copies:
        cp.wait()

    # Context sum (PyTorch: lookup_embeds.sum(dim=0)) -> (1, E).
    summed = jnp.sum(gather_buf[...], axis=0, keepdims=True)

    # Linear tile on pre-transposed weight: (1, E) @ (E, TV) + (1, TV).
    out_ref[...] = (
        jnp.dot(summed.astype(wt_ref.dtype), wt_ref[...],
                preferred_element_type=jnp.float32)
        + b_ref[...]
    )


def cbow_forward(inputs, emb_table, w, b, *, tv=None):
    """inputs: (n_ctx,) int32; emb_table: (V, E); w: (V, E); b: (V,) -> (V,)."""
    vocab_size, emb_size = emb_table.shape

    # Vocab tile: big enough to pipeline the weight stream, small enough that
    # 2x double-buffered (E, TV) blocks stay well under v7x's 64 MiB VMEM.
    if tv is None:
        tv = 512 if vocab_size >= 512 else (128 if vocab_size >= 128 else vocab_size)
    n_tiles = pl.cdiv(vocab_size, tv)
    v_pad = n_tiles * tv

    # Pre-transpose the weight once (parameter-side, done by XLA outside the
    # kernel) and pad the vocab dim to a multiple of the tile.
    wt = jnp.pad(w.T, ((0, 0), (0, v_pad - vocab_size)))                  # (E, v_pad)
    b2d = jnp.pad(b.reshape(1, vocab_size), ((0, 0), (0, v_pad - vocab_size)))

    # Clamp ids so a bad token id cannot generate an out-of-bounds HBM read.
    idx = jnp.clip(inputs.astype(jnp.int32), 0, vocab_size - 1)
    n_ctx = idx.shape[0]

    out = pl.pallas_call(
        cbow_kernel,
        out_shape=jax.ShapeDtypeStruct((1, v_pad), jnp.float32),
        grid_spec=pltpu.PrefetchScalarGridSpec(
            num_scalar_prefetch=1,                       # token ids land in SMEM
            grid=(n_tiles,),
            in_specs=[
                pl.BlockSpec(memory_space=pl.ANY),       # embedding table stays in HBM
                pl.BlockSpec((emb_size, tv), lambda i, ids: (0, i)),
                pl.BlockSpec((1, tv), lambda i, ids: (0, i)),
            ],
            out_specs=pl.BlockSpec((1, tv), lambda i, ids: (0, i)),
            scratch_shapes=[
                pltpu.VMEM((n_ctx, emb_size), emb_table.dtype),
                pltpu.SemaphoreType.DMA((n_ctx,)),
            ],
        ),
        compiler_params=pltpu.CompilerParams(
            dimension_semantics=("parallel",),           # vocab tiles are independent
            vmem_limit_bytes=32 * 1024 * 1024,
        ),
    )(idx, emb_table, wt, b2d)
    return out[0, :vocab_size]


if __name__ == "__main__":
    # Small shapes consistent with CBOW.__init__ (vocab not tile-aligned on
    # purpose, to exercise the padded vocab tiling).
    context_size = 2
    n_ctx = 2 * context_size          # 4 context words
    embedding_size = 128
    vocab_size = 1000

    key = jax.random.PRNGKey(0)
    k_emb, k_w, k_b, k_idx = jax.random.split(key, 4)

    emb_table = jax.random.normal(k_emb, (vocab_size, embedding_size), jnp.float32)
    w = jax.random.normal(k_w, (vocab_size, embedding_size), jnp.float32) * 0.05
    b = jax.random.normal(k_b, (vocab_size,), jnp.float32) * 0.05

    inputs = jax.random.randint(k_idx, (n_ctx,), 0, vocab_size, jnp.int32)

    out = jax.block_until_ready(cbow_forward(inputs, emb_table, w, b))

    # Pure-JAX reference.
    ref = emb_table[inputs].sum(axis=0) @ w.T + b
    assert out.shape == (vocab_size,)
    assert jnp.allclose(out, ref, atol=1e-4, rtol=1e-4), "mismatch vs reference"

    print("KERNEL_OK")
</pallas_src>

<mosaic_0001>
module attributes {stable_mosaic.version = 11 : i64} {
  func.func @cbow_kernel(%arg0: i32, %arg1: memref<4xi32, #tpu.memory_space<smem>>, %arg2: memref<1000x128xf32, #tpu.memory_space<any>>, %arg3: memref<128x512xf32, #tpu.memory_space<vmem>>, %arg4: memref<1x512xf32, #tpu.memory_space<vmem>>, %arg5: memref<1x512xf32, #tpu.memory_space<vmem>>, %arg6: memref<4x128xf32, #tpu.memory_space<vmem>>, %arg7: memref<4x!tpu.dma_semaphore, #tpu.memory_space<semaphore_mem>>) attributes {dimension_semantics = [#tpu.dimension_semantics<parallel>], iteration_bounds = array<i64: 2>, scalar_prefetch = 1 : i64, scratch_operands = 2 : i64, tpu.core_type = #tpu.core_type<tc>, window_params = [{}, {transform_indices = @transform_1, window_bounds = array<i64: 128, 512>}, {transform_indices = @transform_2, window_bounds = array<i64: 1, 512>}, {transform_indices = @transform_3, window_bounds = array<i64: 1, 512>}]} {
    %c0 = arith.constant 0 : index
    %0 = memref.load %arg1[%c0] : memref<4xi32, #tpu.memory_space<smem>>
    %c0_i32 = arith.constant 0 : i32
    %c0_i32_0 = arith.constant 0 : i32
    %1 = tpu.memref_slice %arg2[%0, %c0_i32_0] : memref<1000x128xf32, #tpu.memory_space<any>> -> memref<1x128xf32, #tpu.memory_space<any>>
    %c0_i32_1 = arith.constant 0 : i32
    %c0_i32_2 = arith.constant 0 : i32
    %2 = tpu.memref_slice %arg6[%c0_i32_1, %c0_i32_2] : memref<4x128xf32, #tpu.memory_space<vmem>> -> memref<1x128xf32, #tpu.memory_space<vmem>>
    %3 = tpu.memref_slice %arg7[%c0_i32] : memref<4x!tpu.dma_semaphore, #tpu.memory_space<semaphore_mem>> -> memref<1x!tpu.dma_semaphore, #tpu.memory_space<semaphore_mem>>
    %4 = tpu.memref_squeeze %3 : memref<1x!tpu.dma_semaphore, #tpu.memory_space<semaphore_mem>> -> memref<!tpu.dma_semaphore, #tpu.memory_space<semaphore_mem>>
    tpu.enqueue_dma source(%1 : memref<1x128xf32, #tpu.memory_space<any>>) target(%2 : memref<1x128xf32, #tpu.memory_space<vmem>>) target_semaphore(%4 : memref<!tpu.dma_semaphore, #tpu.memory_space<semaphore_mem>>)
    %c1 = arith.constant 1 : index
    %5 = memref.load %arg1[%c1] : memref<4xi32, #tpu.memory_space<smem>>
    %c1_i32 = arith.constant 1 : i32
    %c0_i32_3 = arith.constant 0 : i32
    %6 = tpu.memref_slice %arg2[%5, %c0_i32_3] : memref<1000x128xf32, #tpu.memory_space<any>> -> memref<1x128xf32, #tpu.memory_space<any>>
    %c1_i32_4 = arith.constant 1 : i32
    %c0_i32_5 = arith.constant 0 : i32
    %7 = tpu.memref_slice %arg6[%c1_i32_4, %c0_i32_5] : memref<4x128xf32, #tpu.memory_space<vmem>> -> memref<1x128xf32, #tpu.memory_space<vmem>>
    %8 = tpu.memref_slice %arg7[%c1_i32] : memref<4x!tpu.dma_semaphore, #tpu.memory_space<semaphore_mem>> -> memref<1x!tpu.dma_semaphore, #tpu.memory_space<semaphore_mem>>
    %9 = tpu.memref_squeeze %8 : memref<1x!tpu.dma_semaphore, #tpu.memory_space<semaphore_mem>> -> memref<!tpu.dma_semaphore, #tpu.memory_space<semaphore_mem>>
    tpu.enqueue_dma source(%6 : memref<1x128xf32, #tpu.memory_space<any>>) target(%7 : memref<1x128xf32, #tpu.memory_space<vmem>>) target_semaphore(%9 : memref<!tpu.dma_semaphore, #tpu.memory_space<semaphore_mem>>)
    %c2 = arith.constant 2 : index
    %10 = memref.load %arg1[%c2] : memref<4xi32, #tpu.memory_space<smem>>
    %c2_i32 = arith.constant 2 : i32
    %c0_i32_6 = arith.constant 0 : i32
    %11 = tpu.memref_slice %arg2[%10, %c0_i32_6] : memref<1000x128xf32, #tpu.memory_space<any>> -> memref<1x128xf32, #tpu.memory_space<any>>
    %c2_i32_7 = arith.constant 2 : i32
    %c0_i32_8 = arith.constant 0 : i32
    %12 = tpu.memref_slice %arg6[%c2_i32_7, %c0_i32_8] : memref<4x128xf32, #tpu.memory_space<vmem>> -> memref<1x128xf32, #tpu.memory_space<vmem>>
    %13 = tpu.memref_slice %arg7[%c2_i32] : memref<4x!tpu.dma_semaphore, #tpu.memory_space<semaphore_mem>> -> memref<1x!tpu.dma_semaphore, #tpu.memory_space<semaphore_mem>>
    %14 = tpu.memref_squeeze %13 : memref<1x!tpu.dma_semaphore, #tpu.memory_space<semaphore_mem>> -> memref<!tpu.dma_semaphore, #tpu.memory_space<semaphore_mem>>
    tpu.enqueue_dma source(%11 : memref<1x128xf32, #tpu.memory_space<any>>) target(%12 : memref<1x128xf32, #tpu.memory_space<vmem>>) target_semaphore(%14 : memref<!tpu.dma_semaphore, #tpu.memory_space<semaphore_mem>>)
    %c3 = arith.constant 3 : index
    %15 = memref.load %arg1[%c3] : memref<4xi32, #tpu.memory_space<smem>>
    %c3_i32 = arith.constant 3 : i32
    %c0_i32_9 = arith.constant 0 : i32
    %16 = tpu.memref_slice %arg2[%15, %c0_i32_9] : memref<1000x128xf32, #tpu.memory_space<any>> -> memref<1x128xf32, #tpu.memory_space<any>>
    %c3_i32_10 = arith.constant 3 : i32
    %c0_i32_11 = arith.constant 0 : i32
    %17 = tpu.memref_slice %arg6[%c3_i32_10, %c0_i32_11] : memref<4x128xf32, #tpu.memory_space<vmem>> -> memref<1x128xf32, #tpu.memory_space<vmem>>
    %18 = tpu.memref_slice %arg7[%c3_i32] : memref<4x!tpu.dma_semaphore, #tpu.memory_space<semaphore_mem>> -> memref<1x!tpu.dma_semaphore, #tpu.memory_space<semaphore_mem>>
    %19 = tpu.memref_squeeze %18 : memref<1x!tpu.dma_semaphore, #tpu.memory_space<semaphore_mem>> -> memref<!tpu.dma_semaphore, #tpu.memory_space<semaphore_mem>>
    tpu.enqueue_dma source(%16 : memref<1x128xf32, #tpu.memory_space<any>>) target(%17 : memref<1x128xf32, #tpu.memory_space<vmem>>) target_semaphore(%19 : memref<!tpu.dma_semaphore, #tpu.memory_space<semaphore_mem>>)
    %c0_i32_12 = arith.constant 0 : i32
    %c0_i32_13 = arith.constant 0 : i32
    %20 = tpu.memref_slice %arg2[%0, %c0_i32_13] : memref<1000x128xf32, #tpu.memory_space<any>> -> memref<1x128xf32, #tpu.memory_space<any>>
    %c0_i32_14 = arith.constant 0 : i32
    %c0_i32_15 = arith.constant 0 : i32
    %21 = tpu.memref_slice %arg6[%c0_i32_14, %c0_i32_15] : memref<4x128xf32, #tpu.memory_space<vmem>> -> memref<1x128xf32, #tpu.memory_space<vmem>>
    %22 = tpu.memref_slice %arg7[%c0_i32_12] : memref<4x!tpu.dma_semaphore, #tpu.memory_space<semaphore_mem>> -> memref<1x!tpu.dma_semaphore, #tpu.memory_space<semaphore_mem>>
    %23 = tpu.memref_squeeze %22 : memref<1x!tpu.dma_semaphore, #tpu.memory_space<semaphore_mem>> -> memref<!tpu.dma_semaphore, #tpu.memory_space<semaphore_mem>>
    tpu.wait_dma2 semaphore(%23 : memref<!tpu.dma_semaphore, #tpu.memory_space<semaphore_mem>>) src(%20 : memref<1x128xf32, #tpu.memory_space<any>>) dst(%21 : memref<1x128xf32, #tpu.memory_space<vmem>>)
    %c1_i32_16 = arith.constant 1 : i32
    %c0_i32_17 = arith.constant 0 : i32
    %24 = tpu.memref_slice %arg2[%5, %c0_i32_17] : memref<1000x128xf32, #tpu.memory_space<any>> -> memref<1x128xf32, #tpu.memory_space<any>>
    %c1_i32_18 = arith.constant 1 : i32
    %c0_i32_19 = arith.constant 0 : i32
    %25 = tpu.memref_slice %arg6[%c1_i32_18, %c0_i32_19] : memref<4x128xf32, #tpu.memory_space<vmem>> -> memref<1x128xf32, #tpu.memory_space<vmem>>
    %26 = tpu.memref_slice %arg7[%c1_i32_16] : memref<4x!tpu.dma_semaphore, #tpu.memory_space<semaphore_mem>> -> memref<1x!tpu.dma_semaphore, #tpu.memory_space<semaphore_mem>>
    %27 = tpu.memref_squeeze %26 : memref<1x!tpu.dma_semaphore, #tpu.memory_space<semaphore_mem>> -> memref<!tpu.dma_semaphore, #tpu.memory_space<semaphore_mem>>
    tpu.wait_dma2 semaphore(%27 : memref<!tpu.dma_semaphore, #tpu.memory_space<semaphore_mem>>) src(%24 : memref<1x128xf32, #tpu.memory_space<any>>) dst(%25 : memref<1x128xf32, #tpu.memory_space<vmem>>)
    %c2_i32_20 = arith.constant 2 : i32
    %c0_i32_21 = arith.constant 0 : i32
    %28 = tpu.memref_slice %arg2[%10, %c0_i32_21] : memref<1000x128xf32, #tpu.memory_space<any>> -> memref<1x128xf32, #tpu.memory_space<any>>
    %c2_i32_22 = arith.constant 2 : i32
    %c0_i32_23 = arith.constant 0 : i32
    %29 = tpu.memref_slice %arg6[%c2_i32_22, %c0_i32_23] : memref<4x128xf32, #tpu.memory_space<vmem>> -> memref<1x128xf32, #tpu.memory_space<vmem>>
    %30 = tpu.memref_slice %arg7[%c2_i32_20] : memref<4x!tpu.dma_semaphore, #tpu.memory_space<semaphore_mem>> -> memref<1x!tpu.dma_semaphore, #tpu.memory_space<semaphore_mem>>
    %31 = tpu.memref_squeeze %30 : memref<1x!tpu.dma_semaphore, #tpu.memory_space<semaphore_mem>> -> memref<!tpu.dma_semaphore, #tpu.memory_space<semaphore_mem>>
    tpu.wait_dma2 semaphore(%31 : memref<!tpu.dma_semaphore, #tpu.memory_space<semaphore_mem>>) src(%28 : memref<1x128xf32, #tpu.memory_space<any>>) dst(%29 : memref<1x128xf32, #tpu.memory_space<vmem>>)
    %c3_i32_24 = arith.constant 3 : i32
    %c0_i32_25 = arith.constant 0 : i32
    %32 = tpu.memref_slice %arg2[%15, %c0_i32_25] : memref<1000x128xf32, #tpu.memory_space<any>> -> memref<1x128xf32, #tpu.memory_space<any>>
    %c3_i32_26 = arith.constant 3 : i32
    %c0_i32_27 = arith.constant 0 : i32
    %33 = tpu.memref_slice %arg6[%c3_i32_26, %c0_i32_27] : memref<4x128xf32, #tpu.memory_space<vmem>> -> memref<1x128xf32, #tpu.memory_space<vmem>>
    %34 = tpu.memref_slice %arg7[%c3_i32_24] : memref<4x!tpu.dma_semaphore, #tpu.memory_space<semaphore_mem>> -> memref<1x!tpu.dma_semaphore, #tpu.memory_space<semaphore_mem>>
    %35 = tpu.memref_squeeze %34 : memref<1x!tpu.dma_semaphore, #tpu.memory_space<semaphore_mem>> -> memref<!tpu.dma_semaphore, #tpu.memory_space<semaphore_mem>>
    tpu.wait_dma2 semaphore(%35 : memref<!tpu.dma_semaphore, #tpu.memory_space<semaphore_mem>>) src(%32 : memref<1x128xf32, #tpu.memory_space<any>>) dst(%33 : memref<1x128xf32, #tpu.memory_space<vmem>>)
    %c0_28 = arith.constant 0 : index
    %c0_29 = arith.constant 0 : index
    %36 = vector.load %arg6[%c0_28, %c0_29] : memref<4x128xf32, #tpu.memory_space<vmem>>, vector<4x128xf32>
    %cst = arith.constant dense<0.000000e+00> : vector<128xf32>
    %37 = vector.multi_reduction <add>, %36, %cst [0] : vector<4x128xf32> to vector<128xf32>
    %38 = vector.shape_cast %37 : vector<128xf32> to vector<1x128xf32>
    %c0_30 = arith.constant 0 : index
    %c0_31 = arith.constant 0 : index
    %39 = vector.load %arg3[%c0_30, %c0_31] : memref<128x512xf32, #tpu.memory_space<vmem>>, vector<128x512xf32>
    %cst_32 = arith.constant dense<0.000000e+00> : vector<1x512xf32>
    %40 = tpu.matmul %38, %39, %cst_32 {dimension_numbers = #tpu.dot_dimension_numbers<[1], [0], [0], [1], [0, 0, 1, 1], [], []>} : vector<1x128xf32>, vector<128x512xf32>, vector<1x512xf32> -> vector<1x512xf32>
    %c0_33 = arith.constant 0 : index
    %c0_34 = arith.constant 0 : index
    %41 = vector.load %arg4[%c0_33, %c0_34] : memref<1x512xf32, #tpu.memory_space<vmem>>, vector<1x512xf32>
    %42 = arith.addf %40, %41 : vector<1x512xf32>
    %c0_35 = arith.constant 0 : index
    %c0_36 = arith.constant 0 : index
    %43 = vector.load %arg5[%c0_35, %c0_36] : memref<1x512xf32, #tpu.memory_space<vmem>>, vector<1x512xf32>
    tpu.vector_store %arg5[%c0_35, %c0_36], %42 {strides = array<i32>} : memref<1x512xf32, #tpu.memory_space<vmem>>, vector<1x512xf32>,
    return
  }
  func.func @transform_1(%arg0: i32, %arg1: memref<4xi32, #tpu.memory_space<smem>>) -> (i32, i32) {
    %c0_i32 = arith.constant 0 : i32
    %c0_i32_0 = arith.constant 0 : i32
    return %c0_i32, %arg0 : i32, i32
  }
  func.func @transform_2(%arg0: i32, %arg1: memref<4xi32, #tpu.memory_space<smem>>) -> (i32, i32) {
    %c0_i32 = arith.constant 0 : i32
    %c0_i32_0 = arith.constant 0 : i32
    return %c0_i32, %arg0 : i32, i32
  }
  func.func @transform_3(%arg0: i32, %arg1: memref<4xi32, #tpu.memory_space<smem>>) -> (i32, i32) {
    %c0_i32 = arith.constant 0 : i32
    %c0_i32_0 = arith.constant 0 : i32
    return %c0_i32, %arg0 : i32, i32
  }
}

</mosaic_0001>

<llo_original>
// kernel: tpu_custom_call.1
$region0: #{tpu_custom_call.1}
  #allocation0 [shape = 'u32[]', space=smem, size = 0x4, offset = 0x4, fixed_abs, tag = 'smem constant byte address 0x4 - core index']
  #allocation1 [shape = 'u32[144,128]{1,0:T(1,128)}', space=vmem, size = 0x12000, scoped, tag = 'internal scratch']
  #allocation2 [shape = 'f32[4,128]{1,0:T(4,128)}', space=vmem, size = 0x800, scoped, tag = 'scratch operand']
  #allocation3 [shape = 's32[4]{0}', space=sflag, size = 0x10, scoped, tag = 'scratch operand']
  #allocation4 [shape = 's32[1]{0}', space=sflag, size = 0x4, scoped, tag = 'scoped memory for tpu_custom_call.1']
  #allocation5 [shape = 'u8[512]{0}', space=smem, size = 0x200, scoped, tag = 'prefetched SMEM operand 0']
  #allocation10 [shape = 's32[]', space=sflag, size = 0x4, offset = 0, fixed_abs, tag = 'sflag constant byte address 0x0 - dummy sync flag']
  #allocation11 [shape = 's32[]', space=sflag, size = 0x4, offset = 0, fixed_abs, tag = 'sflag constant byte address 0x0 - dummy sync flag']
  #allocation12 [shape = 'u32[]', space=smem, size = 0x4, offset = 0x44, fixed_abs, tag = 'smem constant byte address 0x44 - assertion arg 0']
  #allocation13 [shape = 'u32[]', space=smem, size = 0x4, offset = 0x48, fixed_abs, tag = 'smem constant byte address 0x48 - assertion arg 1']
  #allocation14 [shape = 's32[]', space=sflag, size = 0x4, offset = 0, fixed_abs, tag = 'sflag constant byte address 0x0 - dummy sync flag']
  #allocation15 [shape = 's32[]', space=sflag, size = 0x4, offset = 0, fixed_abs, tag = 'sflag constant byte address 0x0 - dummy sync flag']
  #allocation16 [shape = 's32[]', space=sflag, size = 0x4, offset = 0, fixed_abs, tag = 'sflag constant byte address 0x0 - dummy sync flag']
  #allocation17 [shape = 's32[]', space=sflag, size = 0x4, offset = 0, fixed_abs, tag = 'sflag constant byte address 0x0 - dummy sync flag']
  #allocation18 [shape = 's32[]', space=sflag, size = 0x4, offset = 0, fixed_abs, tag = 'sflag constant byte address 0x0 - dummy sync flag']
  #allocation19 [shape = 's32[]', space=sflag, size = 0x4, offset = 0, fixed_abs, tag = 'sflag constant byte address 0x0 - dummy sync flag']
  %s0 = inlined_call_operand.hbm [shape: s32[4], index: 0, kind: input, shape index: {}]
  %s1 = inlined_call_operand.hbm [shape: f32[1000,128], index: 1, kind: input, shape index: {}]
  %s2 = inlined_call_operand.hbm [shape: f32[128,1024], index: 2, kind: input, shape index: {}]
  %s3 = inlined_call_operand.vmem [shape: f32[1,1024], index: 3, kind: input, shape index: {}]
  %s4 = inlined_call_operand.hbm [shape: f32[1,1024], index: 4, kind: output, shape index: {}]
  %s5 = sld [smem:[#allocation0]]
  $region61: #{tpu_custom_call.1} parent=0
    _
  %s7 = ssub.s32 1, %s5
  %s8 = scalar_select 0, %s7, %s5
  %10 = dma.hbm_to_smem %s0, 16, [#allocation5], [#allocation4]
  %11 = dma.done [#allocation4], 16
  %12 = sfence
  $region1: #{tpu_custom_call.1} parent=0
    #allocation6 [shape = 'u8[524288]{0}', space=vmem, size = 0x80000, scoped, tag = 'input window, operand 2']
    #allocation7 [shape = 's32[2]{0}', space=sflag, size = 0x8, scoped, tag = 'scoped memory for tpu_custom_call.1']
    #allocation8 [shape = 's32[2]{0}', space=sflag, size = 0x8, scoped, tag = 'scoped memory for tpu_custom_call.1']
    #allocation9 [shape = 'u8[4096]{0}', space=vmem, size = 0x1000, scoped, tag = 'output window, operand 0']
    %13 = vsyncpa [#allocation7], 0
    %s14 = scalar_lea.sflag [#allocation7], 1
    %15 = vsyncpa %s14, 0
    %16 = vsyncpa [#allocation8], 0
    %s17 = scalar_lea.sflag [#allocation8], 1
    %18 = vsyncpa %s17, 0
    loop: start=0, step=1, limit=4
    $region2: #{tpu_custom_call.1} parent=1 // loop_pre_header
      _
    $region3: #{tpu_custom_call.1} parent=1 // loop_header
      %s20 = sphi 0, %s24
      %p21 = scmp.ge.s32.totalorder %s20, 4
      %s30 = sphi 0, %s32
      %s33 = sphi 0, %s30
      %s34 = sphi 0, %s33
      %s50 = sphi 0, %s34
      %s56 = sphi 0, %s58
      %s59 = sphi 0, %s56
      %s60 = sphi 0, %s59
      %s76 = sphi 0, %s60
      %s82 = sphi 0, %s84
      %s85 = sphi 0, %s82
      %s86 = sphi 0, %s85
      %s102 = sphi 0, %s86
    $region4: #{tpu_custom_call.1} parent=1 // loop_header_branch
      %23 = sbr.rel (%p21) target = $region8
    $region5: #{tpu_custom_call.1} parent=1 // loop_body
      %s25 = ssub.s32 %s20, 1
      %s26 = ssub.s32 %s20, 2
      %s27 = sadd.s32 %s20, 1
      %s28 = ssub.s32 %s20, %s27
      %p29 = scmp.eq.s32.totalorder %s28, 0
      %s31 = sadd.s32 %s30, 1
      %s32 = scalar_select %p29, %s30, %s31
      %p35 = pneg %p29
      %p36 = scmp.eq.s32.totalorder %s20, 1
      %p37 = por %p35, %p36
      %p38 = scmp.ne.s32.totalorder %s30, %s33
      %p39 = scmp.eq.s32.totalorder %s20, 0
      %p40 = por %p38, %p39
      %p41 = scmp.ne.s32.totalorder %s30, %s33
      %p42 = scmp.eq.s32.totalorder %s25, 1
      %p43 = por %p41, %p42
      %p44 = scmp.ne.s32.totalorder %s33, %s34
      %p45 = scmp.eq.s32.totalorder %s25, 0
      %p46 = por %p44, %p45
      %p47 = scmp.ne.s32.totalorder %s33, %s34
      %p48 = scmp.eq.s32.totalorder %s26, 1
      %p49 = por %p47, %p48
      %p51 = scmp.ne.s32.totalorder %s34, %s50
      %p52 = scmp.eq.s32.totalorder %s26, 0
      %p53 = por %p51, %p52
      %s54 = ssub.s32 %s20, %s27
      %p55 = scmp.eq.s32.totalorder %s54, 0
      %s57 = sadd.s32 %s56, 1
      %s58 = scalar_select %p55, %s56, %s57
      %p61 = pneg %p55
      %p62 = scmp.eq.s32.totalorder %s20, 1
      %p63 = por %p61, %p62
      %p64 = scmp.ne.s32.totalorder %s56, %s59
      %p65 = scmp.eq.s32.totalorder %s20, 0
      %p66 = por %p64, %p65
      %p67 = scmp.ne.s32.totalorder %s56, %s59
      %p68 = scmp.eq.s32.totalorder %s25, 1
      %p69 = por %p67, %p68
      %p70 = scmp.ne.s32.totalorder %s59, %s60
      %p71 = scmp.eq.s32.totalorder %s25, 0
      %p72 = por %p70, %p71
      %p73 = scmp.ne.s32.totalorder %s59, %s60
      %p74 = scmp.eq.s32.totalorder %s26, 1
      %p75 = por %p73, %p74
      %p77 = scmp.ne.s32.totalorder %s60, %s76
      %p78 = scmp.eq.s32.totalorder %s26, 0
      %p79 = por %p77, %p78
      %s80 = ssub.s32 %s20, %s27
      %p81 = scmp.eq.s32.totalorder %s80, 0
      %s83 = sadd.s32 %s82, 1
      %s84 = scalar_select %p81, %s82, %s83
      %p87 = pneg %p81
      %p88 = scmp.eq.s32.totalorder %s20, 1
      %p89 = por %p87, %p88
      %p90 = scmp.ne.s32.totalorder %s82, %s85
      %p91 = scmp.eq.s32.totalorder %s20, 0
      %p92 = por %p90, %p91
      %p93 = scmp.ne.s32.totalorder %s82, %s85
      %p94 = scmp.eq.s32.totalorder %s25, 1
      %p95 = por %p93, %p94
      %p96 = scmp.ne.s32.totalorder %s85, %s86
      %p97 = scmp.eq.s32.totalorder %s25, 0
      %p98 = por %p96, %p97
      %p99 = scmp.ne.s32.totalorder %s85, %s86
      %p100 = scmp.eq.s32.totalorder %s26, 1
      %p101 = por %p99, %p100
      %p103 = scmp.ne.s32.totalorder %s86, %s102
      %p104 = scmp.eq.s32.totalorder %s26, 0
      %p105 = por %p103, %p104
      %p106 = scmp.le.s32.totalorder 1, %s20
      %p107 = scmp.lt.s32.totalorder %s20, 3
      %p108 = pnand %p106, %p107
      %p109 = pneg %p108
      // Predicated region
      $region9: #{tpu_custom_call.1} parent=5 // pred_check
        _
      $region10: #{tpu_custom_call.1} parent=5 // pred_check_branch
        %111 = sbr.rel (%p108) target = $region12
      $region11: #{tpu_custom_call.1} parent=5 // pred_region
        %s112 = ssub.s32 %s20, 1
      $region12: #{tpu_custom_call.1} parent=5 // pred_fallthru
        _
      %p113 = scmp.lt.s32.totalorder %s20, 2
      // Predicated region
      $region13: #{tpu_custom_call.1} parent=5 // pred_check
        %p114 = pneg %p113
      $region14: #{tpu_custom_call.1} parent=5 // pred_check_branch
        %116 = sbr.rel (%p114) target = $region16
      $region15: #{tpu_custom_call.1} parent=5 // pred_region
        // Predicated region
        $region17: #{tpu_custom_call.1} parent=15 // pred_check
          %p117 = pneg %p40
        $region18: #{tpu_custom_call.1} parent=15 // pred_check_branch
          %119 = sbr.rel (%p117) target = $region20
        $region19: #{tpu_custom_call.1} parent=15 // pred_region
          %s120 = sand.u32 %s30, 1
          %s121 = scalar_lea.sflag [#allocation7], %s120
          %s122 = sand.u32 %s30, 1
          %s123 = smul.addr %s122, 512
          %s124 = scalar_lea.vmem [#allocation6], %s123
          %s125 = smul.u32 4, %s20
          %s127 = ssub.s32 8192, 8192
          %128 = vsyncadd %s121, %s127
          %s129 = smul.addr %s125, 128
          %s130 = scalar_lea.hbm %s2, %s129
          %s131 = sshll.u32 %s124, 4
          %s132 = int_to_ptr.vmem [resolvable:$true] %s131
          %137 = dma.hbm_to_vmem [thread:$0]  %s130, 8192, %s132, %s121, 1024, 512, 32
        $region20: #{tpu_custom_call.1} parent=15 // pred_fallthru
          _
        // Predicated region
        $region21: #{tpu_custom_call.1} parent=15 // pred_check
          %p138 = pneg %p66
        $region22: #{tpu_custom_call.1} parent=15 // pred_check_branch
          %140 = sbr.rel (%p138) target = $region24
        $region23: #{tpu_custom_call.1} parent=15 // pred_region
          %s141 = smul.u32 4, %s20
          %p142 = scmp.lt.s32.totalorder %s141, 7
          %s143 = scalar_select %p142, %s141, 7
          %s144 = scalar_lea.vmem %s3, %s143
          %s145 = smul.u32 4, %s20
        $region24: #{tpu_custom_call.1} parent=15 // pred_fallthru
          _
      $region16: #{tpu_custom_call.1} parent=5 // pred_fallthru
        _
      %p146 = scmp.le.s32.totalorder 1, %s20
      %p147 = scmp.lt.s32.totalorder %s20, 3
      %p148 = pnand %p146, %p147
      %p149 = pneg %p148
      // Predicated region
      $region25: #{tpu_custom_call.1} parent=5 // pred_check
        _
      $region26: #{tpu_custom_call.1} parent=5 // pred_check_branch
        %151 = sbr.rel (%p148) target = $region28
      $region27: #{tpu_custom_call.1} parent=5 // pred_region
        %s152 = ssub.s32 %s20, 1
        %s153 = sand.u32 %s33, 1
        %s154 = scalar_lea.sflag [#allocation7], %s153
        %s155 = sand.u32 %s33, 1
        %s156 = smul.addr %s155, 512
        %s157 = scalar_lea.vmem [#allocation6], %s156
        // Predicated region
        $region29: #{tpu_custom_call.1} parent=27 // pred_check
          %p158 = pneg %p46
        $region30: #{tpu_custom_call.1} parent=27 // pred_check_branch
          %160 = sbr.rel (%p158) target = $region32
        $region31: #{tpu_custom_call.1} parent=27 // pred_region
          %161 = dma.done %s154, 8192
        $region32: #{tpu_custom_call.1} parent=27 // pred_fallthru
          _
        %s162 = sand.u32 %s33, 1
        %s163 = scalar_lea.sflag [#allocation7], %s162
        %s164 = sand.u32 %s33, 1
        %s165 = smul.addr %s164, 512
        %s166 = scalar_lea.vmem [#allocation6], %s165
        %p167 = pneg %p46
        %p168 = pneg %p43
        %s169 = smul.u32 4, %s25
        %p170 = scmp.lt.s32.totalorder %s169, 7
        %s171 = scalar_select %p170, %s169, 7
        %s172 = scalar_lea.vmem %s3, %s171
        %p173 = pneg %p72
        %p174 = pneg %p69
        %p175 = pneg %p98
        %p176 = pneg %p95
        %s177 = sand.u32 %s85, 1
        %s178 = scalar_lea.sflag [#allocation8], %s177
        %s179 = sand.u32 %s85, 1
        %s180 = smul.addr %s179, 4
        %s181 = scalar_lea.vmem [#allocation9], %s180
        %s182 = smul.u32 4, %s25
        %s183 = smul.u32 4, %s25
        %p184 = scmp.lt.s32.totalorder %s183, 7
        %s185 = scalar_select %p184, %s183, 7
        %s186 = scalar_lea.vmem %s3, %s185
        %s187 = smul.u32 4, %s25
        %s188 = smul.u32 4, %s25
        %s189 = sld [smem:[#allocation5]]
        %s190 = smul.addr %s189, 16
        %s191 = scalar_lea.hbm %s1, %s190
        // Predicated region
        $region33: #{tpu_custom_call.1} parent=27 // pred_check
          _
        $region34: #{tpu_custom_call.1} parent=27 // pred_check_branch
          %193 = sbr.rel target = $region36
        $region35: #{tpu_custom_call.1} parent=27 // pred_region
          %194 = sst [smem:[#allocation12]] [#allocation11]
          %195 = sst [smem:[#allocation13]] [#allocation10]
        $region36: #{tpu_custom_call.1} parent=27 // pred_fallthru
          _
        %197 = shalt.err (0)
        %s199 = sshll.u32 [#allocation2], 4
        %s200 = int_to_ptr.vmem [resolvable:$true] %s199
        %202 = dma.hbm_to_vmem [thread:$0]  %s191, 16, %s200, [#allocation3]
        %s203 = sld [smem:[#allocation5 + $0x1]]
        %s204 = smul.addr %s203, 16
        %s205 = scalar_lea.hbm %s1, %s204
        %s206 = scalar_lea.vmem [#allocation2], 1
        %s207 = scalar_lea.sflag [#allocation3], 1
        // Predicated region
        $region37: #{tpu_custom_call.1} parent=27 // pred_check
          _
        $region38: #{tpu_custom_call.1} parent=27 // pred_check_branch
          %209 = sbr.rel target = $region40
        $region39: #{tpu_custom_call.1} parent=27 // pred_region
          %210 = sst [smem:[#allocation12]] [#allocation15]
          %211 = sst [smem:[#allocation13]] [#allocation14]
        $region40: #{tpu_custom_call.1} parent=27 // pred_fallthru
          _
        %213 = shalt.err (0)
        %s215 = sshll.u32 %s206, 4
        %s216 = int_to_ptr.vmem [resolvable:$true] %s215
        %218 = dma.hbm_to_vmem [thread:$0]  %s205, 16, %s216, %s207
        %s219 = sld [smem:[#allocation5 + $0x2]]
        %s220 = smul.addr %s219, 16
        %s221 = scalar_lea.hbm %s1, %s220
        %s222 = scalar_lea.vmem [#allocation2], 2
        %s223 = scalar_lea.sflag [#allocation3], 2
        // Predicated region
        $region41: #{tpu_custom_call.1} parent=27 // pred_check
          _
        $region42: #{tpu_custom_call.1} parent=27 // pred_check_branch
          %225 = sbr.rel target = $region44
        $region43: #{tpu_custom_call.1} parent=27 // pred_region
          %226 = sst [smem:[#allocation12]] [#allocation17]
          %227 = sst [smem:[#allocation13]] [#allocation16]
        $region44: #{tpu_custom_call.1} parent=27 // pred_fallthru
          _
        %229 = shalt.err (0)
        %s231 = sshll.u32 %s222, 4
        %s232 = int_to_ptr.vmem [resolvable:$true] %s231
        %234 = dma.hbm_to_vmem [thread:$0]  %s221, 16, %s232, %s223
        %s235 = sld [smem:[#allocation5 + $0x3]]
        %s236 = smul.addr %s235, 16
        %s237 = scalar_lea.hbm %s1, %s236
        %s238 = scalar_lea.vmem [#allocation2], 3
        %s239 = scalar_lea.sflag [#allocation3], 3
        // Predicated region
        $region45: #{tpu_custom_call.1} parent=27 // pred_check
          _
        $region46: #{tpu_custom_call.1} parent=27 // pred_check_branch
          %241 = sbr.rel target = $region48
        $region47: #{tpu_custom_call.1} parent=27 // pred_region
          %242 = sst [smem:[#allocation12]] [#allocation19]
          %243 = sst [smem:[#allocation13]] [#allocation18]
        $region48: #{tpu_custom_call.1} parent=27 // pred_fallthru
          _
        %245 = shalt.err (0)
        %s247 = sshll.u32 %s238, 4
        %s248 = int_to_ptr.vmem [resolvable:$true] %s247
        %250 = dma.hbm_to_vmem [thread:$0]  %s237, 16, %s248, %s239
        %s251 = smul.u32 1, 1
        %s252 = sshll.u32 %s251, 4
        %253 = dma.done [#allocation3], %s252
        %s254 = sshll.u32 %s251, 4
        %255 = dma.done %s207, %s254
        %s256 = sshll.u32 %s251, 4
        %257 = dma.done %s223, %s256
        %s258 = sshll.u32 %s251, 4
        %259 = dma.done %s239, %s258
        %v260 = vld [vmem:[#allocation2] sm:$0xf]
        %vm261 = vcmask 1043456
        %v262 = vsel %vm261, %v260, 0.0
        %v263 = vrot.slane %v262, 4
        %v264 = vadd.f32 %v262, %v263
        %v265 = vrot.slane %v264, 2
        %v266 = vadd.f32 %v264, %v265
        %v267 = vrot.slane %v266, 1
        %v268 = vadd.f32 %v266, %v267
        %v269 = vld [vmem:[%s157] sm:$0xff]
        %v270 = vld [vmem:[%s157 + $0x8] sm:$0xff]
        %v271 = vld [vmem:[%s157 + $0x10] sm:$0xff]
        %v272 = vld [vmem:[%s157 + $0x18] sm:$0xff]
        %v273 = vld [vmem:[%s157 + $0x20] sm:$0xff]
        %v274 = vld [vmem:[%s157 + $0x28] sm:$0xff]
        %v275 = vld [vmem:[%s157 + $0x30] sm:$0xff]
        %v276 = vld [vmem:[%s157 + $0x38] sm:$0xff]
        %v277 = vld [vmem:[%s157 + $0x40] sm:$0xff]
        %v278 = vld [vmem:[%s157 + $0x48] sm:$0xff]
        %v279 = vld [vmem:[%s157 + $0x50] sm:$0xff]
        %v280 = vld [vmem:[%s157 + $0x58] sm:$0xff]
        %v281 = vld [vmem:[%s157 + $0x60] sm:$0xff]
        %v282 = vld [vmem:[%s157 + $0x68] sm:$0xff]
        %v283 = vld [vmem:[%s157 + $0x70] sm:$0xff]
        %v284 = vld [vmem:[%s157 + $0x78] sm:$0xff]
        %v285 = vld [vmem:[%s157 + $0x80] sm:$0xff]
        %v286 = vld [vmem:[%s157 + $0x88] sm:$0xff]
        %v287 = vld [vmem:[%s157 + $0x90] sm:$0xff]
        %v288 = vld [vmem:[%s157 + $0x98] sm:$0xff]
        %v289 = vld [vmem:[%s157 + $0xa0] sm:$0xff]
        %v290 = vld [vmem:[%s157 + $0xa8] sm:$0xff]
        %v291 = vld [vmem:[%s157 + $0xb0] sm:$0xff]
        %v292 = vld [vmem:[%s157 + $0xb8] sm:$0xff]
        %v293 = vld [vmem:[%s157 + $0xc0] sm:$0xff]
        %v294 = vld [vmem:[%s157 + $0xc8] sm:$0xff]
        %v295 = vld [vmem:[%s157 + $0xd0] sm:$0xff]
        %v296 = vld [vmem:[%s157 + $0xd8] sm:$0xff]
        %v297 = vld [vmem:[%s157 + $0xe0] sm:$0xff]
        %v298 = vld [vmem:[%s157 + $0xe8] sm:$0xff]
        %v299 = vld [vmem:[%s157 + $0xf0] sm:$0xff]
        %v300 = vld [vmem:[%s157 + $0xf8] sm:$0xff]
        %v301 = vld [vmem:[%s157 + $0x100] sm:$0xff]
        %v302 = vld [vmem:[%s157 + $0x108] sm:$0xff]
        %v303 = vld [vmem:[%s157 + $0x110] sm:$0xff]
        %v304 = vld [vmem:[%s157 + $0x118] sm:$0xff]
        %v305 = vld [vmem:[%s157 + $0x120] sm:$0xff]
        %v306 = vld [vmem:[%s157 + $0x128] sm:$0xff]
        %v307 = vld [vmem:[%s157 + $0x130] sm:$0xff]
        %v308 = vld [vmem:[%s157 + $0x138] sm:$0xff]
        %v309 = vld [vmem:[%s157 + $0x140] sm:$0xff]
        %v310 = vld [vmem:[%s157 + $0x148] sm:$0xff]
        %v311 = vld [vmem:[%s157 + $0x150] sm:$0xff]
        %v312 = vld [vmem:[%s157 + $0x158] sm:$0xff]
        %v313 = vld [vmem:[%s157 + $0x160] sm:$0xff]
        %v314 = vld [vmem:[%s157 + $0x168] sm:$0xff]
        %v315 = vld [vmem:[%s157 + $0x170] sm:$0xff]
        %v316 = vld [vmem:[%s157 + $0x178] sm:$0xff]
        %v317 = vld [vmem:[%s157 + $0x180] sm:$0xff]
        %v318 = vld [vmem:[%s157 + $0x188] sm:$0xff]
        %v319 = vld [vmem:[%s157 + $0x190] sm:$0xff]
        %v320 = vld [vmem:[%s157 + $0x198] sm:$0xff]
        %v321 = vld [vmem:[%s157 + $0x1a0] sm:$0xff]
        %v322 = vld [vmem:[%s157 + $0x1a8] sm:$0xff]
        %v323 = vld [vmem:[%s157 + $0x1b0] sm:$0xff]
        %v324 = vld [vmem:[%s157 + $0x1b8] sm:$0xff]
        %v325 = vld [vmem:[%s157 + $0x1c0] sm:$0xff]
        %v326 = vld [vmem:[%s157 + $0x1c8] sm:$0xff]
        %v327 = vld [vmem:[%s157 + $0x1d0] sm:$0xff]
        %v328 = vld [vmem:[%s157 + $0x1d8] sm:$0xff]
        %v329 = vld [vmem:[%s157 + $0x1e0] sm:$0xff]
        %v330 = vld [vmem:[%s157 + $0x1e8] sm:$0xff]
        %v331 = vld [vmem:[%s157 + $0x1f0] sm:$0xff]
        %v332 = vld [vmem:[%s157 + $0x1f8] sm:$0xff]
        %v333 = vld [vmem:[%s186] sm:$0xf]
        %v335 = vlaneseq
        %v336 = vshrl.u32 %v335, 7
        %v337 = vsub.s32 0, %v336
        %v338 = vrot.slane %v333, %v337
        %v339 = vlaneseq
        %v340 = vshrl.u32 %v339, 7
        %v341 = vsub.s32 1, %v340
        %v342 = vrot.slane %v333, %v341
        %v343 = vlaneseq
        %v344 = vshrl.u32 %v343, 7
        %v345 = vsub.s32 2, %v344
        %v346 = vrot.slane %v333, %v345
        %v347 = vlaneseq
        %v348 = vshrl.u32 %v347, 7
        %v349 = vsub.s32 3, %v348
        %v350 = vrot.slane %v333, %v349
        %355 = vmatprep.subr.mxu0 %v270
        %356 = vmatpush1.msra.mxu0 %v269
        %357 = vmatprep.subr.mxu0 %v274
        %358 = vmatpush1.msra.mxu0 %v273
        %359 = vmatprep.subr.mxu0 %v278
        %360 = vmatpush1.msra.mxu0 %v277
        %361 = vmatprep.subr.mxu0 %v282
        %362 = vmatpush1.msra.mxu0 %v281
        %363 = vmatprep.subr.mxu0 %v286
        %364 = vmatpush1.msra.mxu0 %v285
        %365 = vmatprep.subr.mxu0 %v290
        %366 = vmatpush1.msra.mxu0 %v289
        %367 = vmatprep.subr.mxu0 %v294
        %368 = vmatpush1.msra.mxu0 %v293
        %369 = vmatprep.subr.mxu0 %v298
        %370 = vmatpush1.msra.mxu0 %v297
        %371 = vmatprep.subr.mxu0 %v302
        %372 = vmatpush1.msra.mxu0 %v301
        %373 = vmatprep.subr.mxu0 %v306
        %374 = vmatpush1.msra.mxu0 %v305
        %375 = vmatprep.subr.mxu0 %v310
        %376 = vmatpush1.msra.mxu0 %v309
        %377 = vmatprep.subr.mxu0 %v314
        %378 = vmatpush1.msra.mxu0 %v313
        %379 = vmatprep.subr.mxu0 %v318
        %380 = vmatpush1.msra.mxu0 %v317
        %381 = vmatprep.subr.mxu0 %v322
        %382 = vmatpush1.msra.mxu0 %v321
        %383 = vmatprep.subr.mxu0 %v326
        %384 = vmatpush1.msra.mxu0 %v325
        %385 = vmatprep.subr.mxu0 %v330
        %386 = vmatpush1.msra.mxu0 %v329
        %387 = vmatprep.subr.mxu0 0.0
        %388 = vmatpush1.msra.mxu0 0.0
        %389 = vmatprep.subr.mxu0 0.0
        %390 = vmatpush1.msra.mxu0 0.0
        %391 = vmatprep.subr.mxu0 0.0
        %392 = vmatpush1.msra.mxu0 0.0
        %393 = vmatprep.subr.mxu0 0.0
        %394 = vmatpush1.msra.mxu0 0.0
        %395 = vmatprep.subr.mxu0 0.0
        %396 = vmatpush1.msra.mxu0 0.0
        %397 = vmatprep.subr.mxu0 0.0
        %398 = vmatpush1.msra.mxu0 0.0
        %399 = vmatprep.subr.mxu0 0.0
        %400 = vmatpush1.msra.mxu0 0.0
        %401 = vmatprep.subr.mxu0 0.0
        %402 = vmatpush1.msra.mxu0 0.0
        %403 = vmatprep.subr.mxu0 0.0
        %404 = vmatpush1.msra.mxu0 0.0
        %405 = vmatprep.subr.mxu0 0.0
        %406 = vmatpush1.msra.mxu0 0.0
        %407 = vmatprep.subr.mxu0 0.0
        %408 = vmatpush1.msra.mxu0 0.0
        %409 = vmatprep.subr.mxu0 0.0
        %410 = vmatpush1.msra.mxu0 0.0
        %411 = vmatprep.subr.mxu0 0.0
        %412 = vmatpush1.msra.mxu0 0.0
        %413 = vmatprep.subr.mxu0 0.0
        %414 = vmatpush1.msra.mxu0 0.0
        %415 = vmatprep.subr.mxu0 0.0
        %416 = vmatpush1.msra.mxu0 0.0
        %417 = vmatprep.subr.mxu0 0.0
        %418 = vmatpush1.msra.mxu0 0.0
        %419 = vmatprep.mubr.f32.mxu0 0.0
        %420 = vmatmul.mubr.f32.gmra.mrb[0].mxu0 %v268
        %v421 = vpop.f32.mrb[0].mxu0
        %v422 = vadd.f32 %v338, %v421
        %v423 = vpop.f32.mrb[0].mxu0
        %v424 = vadd.f32 %v342, %v423
        %425 = vdwg.mxu0
        %426 = vmatprep.subr.mxu0 %v272
        %427 = vmatpush1.msra.mxu0 %v271
        %428 = vmatprep.subr.mxu0 %v276
        %429 = vmatpush1.msra.mxu0 %v275
        %430 = vmatprep.subr.mxu0 %v280
        %431 = vmatpush1.msra.mxu0 %v279
        %432 = vmatprep.subr.mxu0 %v284
        %433 = vmatpush1.msra.mxu0 %v283
        %434 = vmatprep.subr.mxu0 %v288
        %435 = vmatpush1.msra.mxu0 %v287
        %436 = vmatprep.subr.mxu0 %v292
        %437 = vmatpush1.msra.mxu0 %v291
        %438 = vmatprep.subr.mxu0 %v296
        %439 = vmatpush1.msra.mxu0 %v295
        %440 = vmatprep.subr.mxu0 %v300
        %441 = vmatpush1.msra.mxu0 %v299
        %442 = vmatprep.subr.mxu0 %v304
        %443 = vmatpush1.msra.mxu0 %v303
        %444 = vmatprep.subr.mxu0 %v308
        %445 = vmatpush1.msra.mxu0 %v307
        %446 = vmatprep.subr.mxu0 %v312
        %447 = vmatpush1.msra.mxu0 %v311
        %448 = vmatprep.subr.mxu0 %v316
        %449 = vmatpush1.msra.mxu0 %v315
        %450 = vmatprep.subr.mxu0 %v320
        %451 = vmatpush1.msra.mxu0 %v319
        %452 = vmatprep.subr.mxu0 %v324
        %453 = vmatpush1.msra.mxu0 %v323
        %454 = vmatprep.subr.mxu0 %v328
        %455 = vmatpush1.msra.mxu0 %v327
        %456 = vmatprep.subr.mxu0 %v332
        %457 = vmatpush1.msra.mxu0 %v331
        %458 = vmatprep.subr.mxu0 0.0
        %459 = vmatpush1.msra.mxu0 0.0
        %460 = vmatprep.subr.mxu0 0.0
        %461 = vmatpush1.msra.mxu0 0.0
        %462 = vmatprep.subr.mxu0 0.0
        %463 = vmatpush1.msra.mxu0 0.0
        %464 = vmatprep.subr.mxu0 0.0
        %465 = vmatpush1.msra.mxu0 0.0
        %466 = vmatprep.subr.mxu0 0.0
        %467 = vmatpush1.msra.mxu0 0.0
        %468 = vmatprep.subr.mxu0 0.0
        %469 = vmatpush1.msra.mxu0 0.0
        %470 = vmatprep.subr.mxu0 0.0
        %471 = vmatpush1.msra.mxu0 0.0
        %472 = vmatprep.subr.mxu0 0.0
        %473 = vmatpush1.msra.mxu0 0.0
        %474 = vmatprep.subr.mxu0 0.0
        %475 = vmatpush1.msra.mxu0 0.0
        %476 = vmatprep.subr.mxu0 0.0
        %477 = vmatpush1.msra.mxu0 0.0
        %478 = vmatprep.subr.mxu0 0.0
        %479 = vmatpush1.msra.mxu0 0.0
        %480 = vmatprep.subr.mxu0 0.0
        %481 = vmatpush1.msra.mxu0 0.0
        %482 = vmatprep.subr.mxu0 0.0
        %483 = vmatpush1.msra.mxu0 0.0
        %484 = vmatprep.subr.mxu0 0.0
        %485 = vmatpush1.msra.mxu0 0.0
        %486 = vmatprep.subr.mxu0 0.0
        %487 = vmatpush1.msra.mxu0 0.0
        %488 = vmatprep.subr.mxu0 0.0
        %489 = vmatpush1.msra.mxu0 0.0
        %490 = vmatprep.mubr.f32.mxu0 0.0
        %491 = vmatmul.mubr.f32.gmra.mrb[0].mxu0 %v268
        %v492 = vpop.f32.mrb[0].mxu0
        %v493 = vadd.f32 %v346, %v492
        %v494 = vpop.f32.mrb[0].mxu0
        %v495 = vadd.f32 %v350, %v494
        %496 = vdwg.mxu0
        %v501 = vcombine.low %v422, %v424
        %v502 = vcombine.low %v493, %v495
        %v504 = vunpack.c.l.s4 1966171168
        %v505 = vunpack.c.0.s8 %v504
        %v506 = vlaneseq
        %v507 = vshrl.u32 %v506, 7
        %v508 = vsub.s32 %v505, %v507
        %v509 = vrot.slane %v501, %v508
        %v511 = vunpack.c.l.s4 1966171168
        %v512 = vunpack.c.0.s8 %v511
        %v513 = vlaneseq
        %v514 = vshrl.u32 %v513, 7
        %v515 = vsub.s32 %v512, %v514
        %v516 = vrot.slane %v502, %v515
        %v517 = vcombine.low %v509, %v516
        %v519 = vunpack.c.l.s4 1966171168
        %v520 = vunpack.c.0.s8 %v519
        %v521 = vlaneseq
        %v522 = vshrl.u32 %v521, 7
        %v523 = vsub.s32 %v520, %v522
        %v524 = vrot.slane %v517, %v523
        %v526 = vlaneseq
        %vm527 = vcmp.ge.s32.totalorder %v526, 0
        %vm528 = vcmp.lt.s32.totalorder %v526, 512
        %vm529 = vmand %vm527, %vm528
        %530 = vst.msk [vmem:[%s181] sm:$0xf] %vm529, %v524
        %s531 = sand.u32 %s85, 1
        %s532 = scalar_lea.sflag [#allocation8], %s531
        %s533 = sand.u32 %s85, 1
        %s534 = smul.addr %s533, 4
        %s535 = scalar_lea.vmem [#allocation9], %s534
        // Predicated region
        $region49: #{tpu_custom_call.1} parent=27 // pred_check
          %p536 = pneg %p95
        $region50: #{tpu_custom_call.1} parent=27 // pred_check_branch
          %538 = sbr.rel (%p536) target = $region52
        $region51: #{tpu_custom_call.1} parent=27 // pred_region
          %s539 = smul.u32 4, %s25
          %s541 = ssub.s32 64, 64
          %542 = vsyncadd %s532, %s541
          %s543 = smul.addr %s539, 16
          %s544 = scalar_lea.hbm %s4, %s543
          %s546 = sshll.u32 %s535, 4
          %s547 = int_to_ptr.vmem [resolvable:$true] %s546
          %549 = dma.vmem_to_hbm [thread:$0]  %s547, 64, %s544, %s532
        $region52: #{tpu_custom_call.1} parent=27 // pred_fallthru
          _
      $region28: #{tpu_custom_call.1} parent=5 // pred_fallthru
        _
      %p550 = scmp.le.s32.totalorder 2, %s20
      // Predicated region
      $region53: #{tpu_custom_call.1} parent=5 // pred_check
        %p551 = pneg %p550
      $region54: #{tpu_custom_call.1} parent=5 // pred_check_branch
        %553 = sbr.rel (%p551) target = $region56
      $region55: #{tpu_custom_call.1} parent=5 // pred_region
        %s554 = ssub.s32 %s20, 2
        // Predicated region
        $region57: #{tpu_custom_call.1} parent=55 // pred_check
          %p555 = pneg %p101
        $region58: #{tpu_custom_call.1} parent=55 // pred_check_branch
          %557 = sbr.rel (%p555) target = $region60
        $region59: #{tpu_custom_call.1} parent=55 // pred_region
          %s558 = sand.u32 %s86, 1
          %s559 = scalar_lea.sflag [#allocation8], %s558
          %s560 = sand.u32 %s86, 1
          %s561 = smul.addr %s560, 4
          %s562 = scalar_lea.vmem [#allocation9], %s561
          %563 = dma.done %s559, 64
        $region60: #{tpu_custom_call.1} parent=55 // pred_fallthru
          _
      $region56: #{tpu_custom_call.1} parent=5 // pred_fallthru
        _
    $region6: #{tpu_custom_call.1} parent=1 // loop_footer
      %s24 = sadd.s32 1, %s20
    $region7: #{tpu_custom_call.1} parent=1 // loop_footer_branch
      %19 = sbr.rel target = $region3
    $region8: #{tpu_custom_call.1} parent=1 // loop_exit
      _
    %564 = vsyncpa [#allocation7], 1
    %s565 = scalar_lea.sflag [#allocation7], 1
    %566 = vsyncpa %s565, 1
    %567 = vsyncpa [#allocation8], 1
    %s568 = scalar_lea.sflag [#allocation8], 1
    %569 = vsyncpa %s568, 1
  %570 = vsyncmov [#allocation3]
  %s571 = vpop.sfrf %570
  %p572 = scmp.eq.s32.totalorder %s571, 0
  %p573 = pneg %p572
  %575 = shalt.err (%p573)
  %s576 = scalar_lea.sflag [#allocation3], 1
  %577 = vsyncmov %s576
  %s578 = vpop.sfrf %577
  %p579 = scmp.eq.s32.totalorder %s578, 0
  %p580 = pneg %p579
  %582 = shalt.err (%p580)
  %s583 = scalar_lea.sflag [#allocation3], 2
  %584 = vsyncmov %s583
  %s585 = vpop.sfrf %584
  %p586 = scmp.eq.s32.totalorder %s585, 0
  %p587 = pneg %p586
  %589 = shalt.err (%p587)
  %s590 = scalar_lea.sflag [#allocation3], 3
  %591 = vsyncmov %s590
  %s592 = vpop.sfrf %591
  %p593 = scmp.eq.s32.totalorder %s592, 0
  %p594 = pneg %p593
  %596 = shalt.err (%p594)

</llo_original>
